<compile_context>
chip_gen: v5e
topology: v5e:2x2
jax: 0.10.0
libtpu: 0.0.40
codegen_flags: <defaults>
</compile_context>

<pallas_src>
import functools
import math

import jax
import jax.numpy as jnp
from jax.experimental import pallas as pl
from jax.experimental.pallas import tpu as pltpu

LANE = 128  # vreg lane width; per-layer lane-block size


# ---------------------------------------------------------------------------
# Fused kernel: all GAT layers + head in one grid-free pallas_call
# ---------------------------------------------------------------------------
def gat_fused_kernel(x_ref, xT_ref, w_ref, adst_ref, bias_ref,
                     fc1wT_ref, fc1b_ref, fc2wT_ref, fc2b_ref, out_ref,
                     *, B, N, n_layer, F_out, fc_hidden):
    x2 = x_ref[...]                      # (B*N, F_in)
    w_aug = w_ref[...]                   # (F_in, n_layer*2*LANE)

    # One MXU matmul yields every layer's h AND the folded e_src column,
    # each at a 128-lane-aligned offset.
    H = jnp.dot(x2, w_aug, preferred_element_type=jnp.float32)

    # e_dst for every (layer, batch, node) in ROW orientation on the MXU.
    # xT_ref is (F_in, B*LANE): batch b's nodes live at lanes [b*LANE, b*LANE+N).
    E_dst = jnp.dot(adst_ref[...], xT_ref[...],
                    preferred_element_type=jnp.float32)        # (n_layer, B*LANE)

    inv_n = jnp.float32(1.0 / N)
    ones_row = jnp.ones((1, N), dtype=jnp.float32)             # hoisted constant

    h1_rows = []
    # Static unroll over batches and layers (B=2, n_layer=2 -> 4 tiny blocks).
    for b in range(B):
        rs = b * N
        acc_b = jnp.zeros((1, fc_hidden), dtype=jnp.float32)
        for l in range(n_layer):
            c_h = 2 * l * LANE
            c_s = (2 * l + 1) * LANE
            h_bl = H[rs:rs + N, c_h:c_h + F_out]               # (N, F_out), aligned
            e_src = H[rs:rs + N, c_s:c_s + 1]                  # (N, 1),    aligned
            e_dst = E_dst[l:l + 1, b * LANE:b * LANE + N]      # (1, N),    aligned

            # e[i, j] = relu(x_i.a_src + x_j.a_dst); relu BEFORE additive mask
            # (equivalence requires relu(e) >= 0 and -9e15 dominating).
            e = jnp.maximum(e_src + e_dst, 0.0)                # (N, N)
            masked = e + bias_ref[rs:rs + N, :]                # additive -9e15 mask

            # softmax over neighbors (torch dim=2); dropout p=0 -> identity.
            mmax = jnp.max(masked, axis=-1, keepdims=True)
            p = jnp.exp(masked - mmax)
            attn = p / jnp.sum(p, axis=-1, keepdims=True)

            agg = jnp.dot(attn, h_bl, preferred_element_type=jnp.float32)
            agg = jnp.maximum(agg, 0.0)                        # outer F.relu

            # mean over nodes as an MXU rank-1 reduce, fused straight into the
            # matching fc1 weight chunk -- no VMEM scratch round-trip.
            m_bl = jnp.dot(ones_row, agg,
                           preferred_element_type=jnp.float32) * inv_n   # (1, F_out)
            acc_b = acc_b + jnp.dot(
                m_bl, fc1wT_ref[l * F_out:(l + 1) * F_out, :],
                preferred_element_type=jnp.float32)            # (1, fc_hidden)
        h1_rows.append(acc_b)

    h1 = jnp.concatenate(h1_rows, axis=0) + fc1b_ref[...]      # (B, fc_hidden)
    h1 = jnp.maximum(h1, 0.0)
    logits = jnp.dot(h1, fc2wT_ref[...],
                     preferred_element_type=jnp.float32) + fc2b_ref[...]

    # F.softmax(..., dim=0): softmax over the batch dimension (exact division).
    z = logits - jnp.max(logits, axis=0, keepdims=True)
    ez = jnp.exp(z)
    out_ref[...] = ez / jnp.sum(ez, axis=0, keepdims=True)


def gat_forward(x, adj, Ws, W2s, fc1_w, fc1_b, fc2_w, fc2_b):
    """Full GAT forward: (B, N, F_in), (B, N, N) -> (B, n_class)."""
    B, N, F_in = x.shape
    n_layer, _, F_out = Ws.shape
    fc_hidden, D = fc1_w.shape
    n_class = fc2_w.shape[0]
    assert D == n_layer * F_out
    assert F_out + 1 <= LANE and N <= LANE

    # Lane-aligned augmented weight (F_in, n_layer*2*128):
    #   block 2l   -> W_l                       (cols [2l*128, 2l*128+F_out))
    #   block 2l+1 -> a_src_l = W_l @ w2_src_l  (col  (2l+1)*128), rest zero.
    w_aug = jnp.zeros((F_in, n_layer * 2 * LANE), dtype=jnp.float32)
    for l in range(n_layer):
        a_src_l = Ws[l] @ W2s[l, 0]                                      # (F_in,)
        w_aug = w_aug.at[:, 2 * l * LANE:2 * l * LANE + F_out].set(Ws[l])
        w_aug = w_aug.at[:, (2 * l + 1) * LANE].set(a_src_l)

    # a_dst rows for the row-orientation e_dst projection: (n_layer, F_in).
    a_dst = jnp.stack([Ws[l] @ W2s[l, 1] for l in range(n_layer)], axis=0)

    # Transposed, per-batch lane-padded x: (F_in, B*128).
    xT = jnp.zeros((F_in, B * LANE), dtype=jnp.float32)
    for b in range(B):
        xT = xT.at[:, b * LANE:b * LANE + N].set(x[b].T)

    # Additive adjacency mask bias (0 where edge, -9e15 where not): (B*N, N).
    bias = jnp.where(adj > 0, 0.0, -9.0e15).astype(jnp.float32).reshape(B * N, N)

    x2 = x.reshape(B * N, F_in)
    fc1_wT = fc1_w.T                                   # (D, fc_hidden)
    fc2_wT = fc2_w.T                                   # (fc_hidden, n_class)

    kernel = functools.partial(gat_fused_kernel, B=B, N=N, n_layer=n_layer,
                               F_out=F_out, fc_hidden=fc_hidden)
    vmem = pl.BlockSpec(memory_space=pltpu.MemorySpace.VMEM)

    inputs = (x2, xT, w_aug, a_dst, bias, fc1_wT, fc1_b[None, :], fc2_wT,
              fc2_b[None, :])

    # Advisory cost estimate so XLA can schedule/overlap this tiny custom call.
    flops = (2 * (B * N) * F_in * (n_layer * 2 * LANE)          # H matmul
             + 2 * n_layer * F_in * (B * LANE)                  # E_dst matmul
             + B * n_layer * (2 * N * N * F_out                 # attn @ h
                              + 2 * N * F_out                   # node-mean reduce
                              + 2 * F_out * fc_hidden           # fc1 chunk
                              + 6 * N * N)                      # logits / softmax VPU
             + 2 * B * fc_hidden * n_class)                     # fc2
    transcendentals = B * n_layer * N * N + B * n_class
    bytes_accessed = (sum(int(a.size) * a.dtype.itemsize for a in inputs)
                      + B * n_class * 4)

    return pl.pallas_call(
        kernel,
        out_shape=jax.ShapeDtypeStruct((B, n_class), jnp.float32),
        in_specs=[vmem] * len(inputs),
        out_specs=vmem,
        cost_estimate=pl.CostEstimate(flops=int(flops),
                                      bytes_accessed=int(bytes_accessed),
                                      transcendentals=int(transcendentals)),
    )(*inputs)


# ---------------------------------------------------------------------------
# Pure-JAX reference (mirrors the PyTorch forward exactly)
# ---------------------------------------------------------------------------
def gat_reference(x, adj, Ws, W2s_flat, fc1_w, fc1_b, fc2_w, fc2_b):
    B, N, _ = x.shape
    n_layer, _, F_out = Ws.shape
    outs = []
    for l in range(n_layer):
        h = (x.reshape(B * N, -1) @ Ws[l]).reshape(B, N, F_out)
        w2 = W2s_flat[l]                                   # (2*F_out, 1)
        e_src = h @ w2[:F_out]                             # (B, N, 1)
        e_dst = h @ w2[F_out:]                             # (B, N, 1)
        e = jax.nn.relu(e_src + jnp.swapaxes(e_dst, 1, 2)) # (B, N, N)
        att = jnp.where(adj > 0, e, jnp.float32(-9.0e15))
        att = jax.nn.softmax(att, axis=2)
        outs.append(jax.nn.relu(jnp.einsum('bij,bjd->bid', att, h)))
    feat = jnp.concatenate(outs, axis=2)
    m = jnp.mean(feat, axis=1)
    h = jax.nn.relu(m @ fc1_w.T + fc1_b)
    logits = h @ fc2_w.T + fc2_b
    return jax.nn.softmax(logits, axis=0)


if __name__ == "__main__":
    # Model hyper-params (small, consistent with the module)
    B, N = 2, 8            # batch, nodes
    n_feat = 16
    agg_hidden = 32
    n_layer = 2
    fc_hidden = 32
    n_class = 4

    key = jax.random.PRNGKey(0)
    keys = jax.random.split(key, 8)

    # Inputs
    x = jax.random.normal(keys[0], (B, N, n_feat), dtype=jnp.float32)
    adj = (jax.random.uniform(keys[1], (B, N, N)) > 0.5).astype(jnp.float32)
    adj = jnp.maximum(adj, jnp.eye(N, dtype=jnp.float32)[None])   # self loops

    # GraphAttentionLayer params (one set per layer), torch-style uniform init
    stdv_w = 1.0 / math.sqrt(agg_hidden)
    Ws = jax.random.uniform(keys[2], (n_layer, n_feat, agg_hidden),
                            minval=-stdv_w, maxval=stdv_w, dtype=jnp.float32)
    stdv_w2 = 1.0  # 1/sqrt(weight2.size(1)) = 1/sqrt(1)
    W2s_flat = jax.random.uniform(keys[3], (n_layer, 2 * agg_hidden, 1),
                                  minval=-stdv_w2, maxval=stdv_w2,
                                  dtype=jnp.float32)
    W2s = W2s_flat.reshape(n_layer, 2, agg_hidden)   # row 0 = src half, 1 = dst half

    # fc layers (torch.nn.Linear default init)
    D = agg_hidden * n_layer
    b1 = 1.0 / math.sqrt(D)
    fc1_w = jax.random.uniform(keys[4], (fc_hidden, D), minval=-b1, maxval=b1,
                               dtype=jnp.float32)
    fc1_b = jax.random.uniform(keys[5], (fc_hidden,), minval=-b1, maxval=b1,
                               dtype=jnp.float32)
    b2 = 1.0 / math.sqrt(fc_hidden)
    fc2_w = jax.random.uniform(keys[6], (n_class, fc_hidden), minval=-b2, maxval=b2,
                               dtype=jnp.float32)
    fc2_b = jax.random.uniform(keys[7], (n_class,), minval=-b2, maxval=b2,
                               dtype=jnp.float32)

    out = gat_forward(x, adj, Ws, W2s, fc1_w, fc1_b, fc2_w, fc2_b)
    out = jax.block_until_ready(out)

    ref = gat_reference(x, adj, Ws, W2s_flat, fc1_w, fc1_b, fc2_w, fc2_b)
    assert out.shape == (B, n_class)
    assert jnp.allclose(out, ref, atol=1e-5, rtol=1e-5), (out, ref)

    print("KERNEL_OK")
</pallas_src>

<mosaic_0001>
module attributes {stable_mosaic.version = 11 : i64} {
  func.func @gat_fused_kernel(%arg0: memref<16x16xf32, #tpu.memory_space<vmem>>, %arg1: memref<16x256xf32, #tpu.memory_space<vmem>>, %arg2: memref<16x512xf32, #tpu.memory_space<vmem>>, %arg3: memref<2x16xf32, #tpu.memory_space<vmem>>, %arg4: memref<16x8xf32, #tpu.memory_space<vmem>>, %arg5: memref<64x32xf32, #tpu.memory_space<vmem>>, %arg6: memref<1x32xf32, #tpu.memory_space<vmem>>, %arg7: memref<32x4xf32, #tpu.memory_space<vmem>>, %arg8: memref<1x4xf32, #tpu.memory_space<vmem>>, %arg9: memref<2x4xf32, #tpu.memory_space<vmem>>) attributes {dimension_semantics = [], scalar_prefetch = 0 : i64, scratch_operands = 0 : i64, tpu.core_type = #tpu.core_type<tc>} {
    %c0 = arith.constant 0 : index
    %c0_0 = arith.constant 0 : index
    %0 = vector.load %arg0[%c0, %c0_0] : memref<16x16xf32, #tpu.memory_space<vmem>>, vector<16x16xf32>
    %c0_1 = arith.constant 0 : index
    %c0_2 = arith.constant 0 : index
    %1 = vector.load %arg2[%c0_1, %c0_2] : memref<16x512xf32, #tpu.memory_space<vmem>>, vector<16x512xf32>
    %cst = arith.constant dense<0.000000e+00> : vector<16x512xf32>
    %2 = tpu.matmul %0, %1, %cst {dimension_numbers = #tpu.dot_dimension_numbers<[1], [0], [0], [1], [0, 0, 1, 1], [], []>} : vector<16x16xf32>, vector<16x512xf32>, vector<16x512xf32> -> vector<16x512xf32>
    %c0_3 = arith.constant 0 : index
    %c0_4 = arith.constant 0 : index
    %3 = vector.load %arg3[%c0_3, %c0_4] : memref<2x16xf32, #tpu.memory_space<vmem>>, vector<2x16xf32>
    %c0_5 = arith.constant 0 : index
    %c0_6 = arith.constant 0 : index
    %4 = vector.load %arg1[%c0_5, %c0_6] : memref<16x256xf32, #tpu.memory_space<vmem>>, vector<16x256xf32>
    %cst_7 = arith.constant dense<0.000000e+00> : vector<2x256xf32>
    %5 = tpu.matmul %3, %4, %cst_7 {dimension_numbers = #tpu.dot_dimension_numbers<[1], [0], [0], [1], [0, 0, 1, 1], [], []>} : vector<2x16xf32>, vector<16x256xf32>, vector<2x256xf32> -> vector<2x256xf32>
    %cst_8 = arith.constant 1.000000e+00 : f32
    %6 = vector.broadcast %cst_8 : f32 to vector<1x8xf32>
    %cst_9 = arith.constant 0.000000e+00 : f32
    %7 = vector.broadcast %cst_9 : f32 to vector<1x32xf32>
    %8 = vector.extract_strided_slice %2 {offsets = [0, 0], sizes = [8, 32], strides = [1, 1]} : vector<16x512xf32> to vector<8x32xf32>
    %9 = vector.extract_strided_slice %2 {offsets = [0, 128], sizes = [8, 1], strides = [1, 1]} : vector<16x512xf32> to vector<8x1xf32>
    %10 = vector.extract_strided_slice %5 {offsets = [0, 0], sizes = [1, 8], strides = [1, 1]} : vector<2x256xf32> to vector<1x8xf32>
    %11 = vector.broadcast %9 : vector<8x1xf32> to vector<8x8xf32>
    %12 = vector.broadcast %10 : vector<1x8xf32> to vector<8x8xf32>
    %13 = arith.addf %11, %12 : vector<8x8xf32>
    %cst_10 = arith.constant 0.000000e+00 : f32
    %14 = vector.broadcast %cst_10 : f32 to vector<8x8xf32>
    %15 = arith.maximumf %13, %14 : vector<8x8xf32>
    %c0_11 = arith.constant 0 : index
    %c0_12 = arith.constant 0 : index
    %16 = vector.load %arg4[%c0_11, %c0_12] : memref<16x8xf32, #tpu.memory_space<vmem>>, vector<8x8xf32>
    %17 = arith.addf %15, %16 : vector<8x8xf32>
    %cst_13 = arith.constant dense<0xFF800000> : vector<8xf32>
    %18 = vector.multi_reduction <maximumf>, %17, %cst_13 [1] : vector<8x8xf32> to vector<8xf32>
    %19 = vector.shape_cast %18 : vector<8xf32> to vector<8x1xf32>
    %20 = vector.broadcast %19 : vector<8x1xf32> to vector<8x8xf32>
    %21 = arith.subf %17, %20 : vector<8x8xf32>
    %22 = math.exp %21 : vector<8x8xf32>
    %cst_14 = arith.constant dense<0.000000e+00> : vector<8xf32>
    %23 = vector.multi_reduction <add>, %22, %cst_14 [1] : vector<8x8xf32> to vector<8xf32>
    %24 = vector.shape_cast %23 : vector<8xf32> to vector<8x1xf32>
    %25 = vector.broadcast %24 : vector<8x1xf32> to vector<8x8xf32>
    %26 = arith.divf %22, %25 : vector<8x8xf32>
    %cst_15 = arith.constant dense<0.000000e+00> : vector<8x32xf32>
    %27 = tpu.matmul %26, %8, %cst_15 {dimension_numbers = #tpu.dot_dimension_numbers<[1], [0], [0], [1], [0, 0, 1, 1], [], []>} : vector<8x8xf32>, vector<8x32xf32>, vector<8x32xf32> -> vector<8x32xf32>
    %cst_16 = arith.constant 0.000000e+00 : f32
    %28 = vector.broadcast %cst_16 : f32 to vector<8x32xf32>
    %29 = arith.maximumf %27, %28 : vector<8x32xf32>
    %cst_17 = arith.constant dense<0.000000e+00> : vector<1x32xf32>
    %30 = tpu.matmul %6, %29, %cst_17 {dimension_numbers = #tpu.dot_dimension_numbers<[1], [0], [0], [1], [0, 0, 1, 1], [], []>} : vector<1x8xf32>, vector<8x32xf32>, vector<1x32xf32> -> vector<1x32xf32>
    %cst_18 = arith.constant 1.250000e-01 : f32
    %31 = vector.broadcast %cst_18 : f32 to vector<1x32xf32>
    %32 = arith.mulf %30, %31 : vector<1x32xf32>
    %c0_19 = arith.constant 0 : index
    %c0_20 = arith.constant 0 : index
    %33 = vector.load %arg5[%c0_19, %c0_20] : memref<64x32xf32, #tpu.memory_space<vmem>>, vector<32x32xf32>
    %cst_21 = arith.constant dense<0.000000e+00> : vector<1x32xf32>
    %34 = tpu.matmul %32, %33, %cst_21 {dimension_numbers = #tpu.dot_dimension_numbers<[1], [0], [0], [1], [0, 0, 1, 1], [], []>} : vector<1x32xf32>, vector<32x32xf32>, vector<1x32xf32> -> vector<1x32xf32>
    %35 = arith.addf %7, %34 : vector<1x32xf32>
    %36 = vector.extract_strided_slice %2 {offsets = [0, 256], sizes = [8, 32], strides = [1, 1]} : vector<16x512xf32> to vector<8x32xf32>
    %37 = vector.extract_strided_slice %2 {offsets = [0, 384], sizes = [8, 1], strides = [1, 1]} : vector<16x512xf32> to vector<8x1xf32>
    %38 = vector.extract_strided_slice %5 {offsets = [1, 0], sizes = [1, 8], strides = [1, 1]} : vector<2x256xf32> to vector<1x8xf32>
    %39 = vector.broadcast %37 : vector<8x1xf32> to vector<8x8xf32>
    %40 = vector.broadcast %38 : vector<1x8xf32> to vector<8x8xf32>
    %41 = arith.addf %39, %40 : vector<8x8xf32>
    %cst_22 = arith.constant 0.000000e+00 : f32
    %42 = vector.broadcast %cst_22 : f32 to vector<8x8xf32>
    %43 = arith.maximumf %41, %42 : vector<8x8xf32>
    %c0_23 = arith.constant 0 : index
    %c0_24 = arith.constant 0 : index
    %44 = vector.load %arg4[%c0_23, %c0_24] : memref<16x8xf32, #tpu.memory_space<vmem>>, vector<8x8xf32>
    %45 = arith.addf %43, %44 : vector<8x8xf32>
    %cst_25 = arith.constant dense<0xFF800000> : vector<8xf32>
    %46 = vector.multi_reduction <maximumf>, %45, %cst_25 [1] : vector<8x8xf32> to vector<8xf32>
    %47 = vector.shape_cast %46 : vector<8xf32> to vector<8x1xf32>
    %48 = vector.broadcast %47 : vector<8x1xf32> to vector<8x8xf32>
    %49 = arith.subf %45, %48 : vector<8x8xf32>
    %50 = math.exp %49 : vector<8x8xf32>
    %cst_26 = arith.constant dense<0.000000e+00> : vector<8xf32>
    %51 = vector.multi_reduction <add>, %50, %cst_26 [1] : vector<8x8xf32> to vector<8xf32>
    %52 = vector.shape_cast %51 : vector<8xf32> to vector<8x1xf32>
    %53 = vector.broadcast %52 : vector<8x1xf32> to vector<8x8xf32>
    %54 = arith.divf %50, %53 : vector<8x8xf32>
    %cst_27 = arith.constant dense<0.000000e+00> : vector<8x32xf32>
    %55 = tpu.matmul %54, %36, %cst_27 {dimension_numbers = #tpu.dot_dimension_numbers<[1], [0], [0], [1], [0, 0, 1, 1], [], []>} : vector<8x8xf32>, vector<8x32xf32>, vector<8x32xf32> -> vector<8x32xf32>
    %cst_28 = arith.constant 0.000000e+00 : f32
    %56 = vector.broadcast %cst_28 : f32 to vector<8x32xf32>
    %57 = arith.maximumf %55, %56 : vector<8x32xf32>
    %cst_29 = arith.constant dense<0.000000e+00> : vector<1x32xf32>
    %58 = tpu.matmul %6, %57, %cst_29 {dimension_numbers = #tpu.dot_dimension_numbers<[1], [0], [0], [1], [0, 0, 1, 1], [], []>} : vector<1x8xf32>, vector<8x32xf32>, vector<1x32xf32> -> vector<1x32xf32>
    %cst_30 = arith.constant 1.250000e-01 : f32
    %59 = vector.broadcast %cst_30 : f32 to vector<1x32xf32>
    %60 = arith.mulf %58, %59 : vector<1x32xf32>
    %c32 = arith.constant 32 : index
    %c0_31 = arith.constant 0 : index
    %61 = vector.load %arg5[%c32, %c0_31] : memref<64x32xf32, #tpu.memory_space<vmem>>, vector<32x32xf32>
    %cst_32 = arith.constant dense<0.000000e+00> : vector<1x32xf32>
    %62 = tpu.matmul %60, %61, %cst_32 {dimension_numbers = #tpu.dot_dimension_numbers<[1], [0], [0], [1], [0, 0, 1, 1], [], []>} : vector<1x32xf32>, vector<32x32xf32>, vector<1x32xf32> -> vector<1x32xf32>
    %63 = arith.addf %35, %62 : vector<1x32xf32>
    %cst_33 = arith.constant 0.000000e+00 : f32
    %64 = vector.broadcast %cst_33 : f32 to vector<1x32xf32>
    %65 = vector.extract_strided_slice %2 {offsets = [8, 0], sizes = [8, 32], strides = [1, 1]} : vector<16x512xf32> to vector<8x32xf32>
    %66 = vector.extract_strided_slice %2 {offsets = [8, 128], sizes = [8, 1], strides = [1, 1]} : vector<16x512xf32> to vector<8x1xf32>
    %67 = vector.extract_strided_slice %5 {offsets = [0, 128], sizes = [1, 8], strides = [1, 1]} : vector<2x256xf32> to vector<1x8xf32>
    %68 = vector.broadcast %66 : vector<8x1xf32> to vector<8x8xf32>
    %69 = vector.broadcast %67 : vector<1x8xf32> to vector<8x8xf32>
    %70 = arith.addf %68, %69 : vector<8x8xf32>
    %cst_34 = arith.constant 0.000000e+00 : f32
    %71 = vector.broadcast %cst_34 : f32 to vector<8x8xf32>
    %72 = arith.maximumf %70, %71 : vector<8x8xf32>
    %c8 = arith.constant 8 : index
    %c0_35 = arith.constant 0 : index
    %73 = vector.load %arg4[%c8, %c0_35] : memref<16x8xf32, #tpu.memory_space<vmem>>, vector<8x8xf32>
    %74 = arith.addf %72, %73 : vector<8x8xf32>
    %cst_36 = arith.constant dense<0xFF800000> : vector<8xf32>
    %75 = vector.multi_reduction <maximumf>, %74, %cst_36 [1] : vector<8x8xf32> to vector<8xf32>
    %76 = vector.shape_cast %75 : vector<8xf32> to vector<8x1xf32>
    %77 = vector.broadcast %76 : vector<8x1xf32> to vector<8x8xf32>
    %78 = arith.subf %74, %77 : vector<8x8xf32>
    %79 = math.exp %78 : vector<8x8xf32>
    %cst_37 = arith.constant dense<0.000000e+00> : vector<8xf32>
    %80 = vector.multi_reduction <add>, %79, %cst_37 [1] : vector<8x8xf32> to vector<8xf32>
    %81 = vector.shape_cast %80 : vector<8xf32> to vector<8x1xf32>
    %82 = vector.broadcast %81 : vector<8x1xf32> to vector<8x8xf32>
    %83 = arith.divf %79, %82 : vector<8x8xf32>
    %cst_38 = arith.constant dense<0.000000e+00> : vector<8x32xf32>
    %84 = tpu.matmul %83, %65, %cst_38 {dimension_numbers = #tpu.dot_dimension_numbers<[1], [0], [0], [1], [0, 0, 1, 1], [], []>} : vector<8x8xf32>, vector<8x32xf32>, vector<8x32xf32> -> vector<8x32xf32>
    %cst_39 = arith.constant 0.000000e+00 : f32
    %85 = vector.broadcast %cst_39 : f32 to vector<8x32xf32>
    %86 = arith.maximumf %84, %85 : vector<8x32xf32>
    %cst_40 = arith.constant dense<0.000000e+00> : vector<1x32xf32>
    %87 = tpu.matmul %6, %86, %cst_40 {dimension_numbers = #tpu.dot_dimension_numbers<[1], [0], [0], [1], [0, 0, 1, 1], [], []>} : vector<1x8xf32>, vector<8x32xf32>, vector<1x32xf32> -> vector<1x32xf32>
    %cst_41 = arith.constant 1.250000e-01 : f32
    %88 = vector.broadcast %cst_41 : f32 to vector<1x32xf32>
    %89 = arith.mulf %87, %88 : vector<1x32xf32>
    %c0_42 = arith.constant 0 : index
    %c0_43 = arith.constant 0 : index
    %90 = vector.load %arg5[%c0_42, %c0_43] : memref<64x32xf32, #tpu.memory_space<vmem>>, vector<32x32xf32>
    %cst_44 = arith.constant dense<0.000000e+00> : vector<1x32xf32>
    %91 = tpu.matmul %89, %90, %cst_44 {dimension_numbers = #tpu.dot_dimension_numbers<[1], [0], [0], [1], [0, 0, 1, 1], [], []>} : vector<1x32xf32>, vector<32x32xf32>, vector<1x32xf32> -> vector<1x32xf32>
    %92 = arith.addf %64, %91 : vector<1x32xf32>
    %93 = vector.extract_strided_slice %2 {offsets = [8, 256], sizes = [8, 32], strides = [1, 1]} : vector<16x512xf32> to vector<8x32xf32>
    %94 = vector.extract_strided_slice %2 {offsets = [8, 384], sizes = [8, 1], strides = [1, 1]} : vector<16x512xf32> to vector<8x1xf32>
    %95 = vector.extract_strided_slice %5 {offsets = [1, 128], sizes = [1, 8], strides = [1, 1]} : vector<2x256xf32> to vector<1x8xf32>
    %96 = vector.broadcast %94 : vector<8x1xf32> to vector<8x8xf32>
    %97 = vector.broadcast %95 : vector<1x8xf32> to vector<8x8xf32>
    %98 = arith.addf %96, %97 : vector<8x8xf32>
    %cst_45 = arith.constant 0.000000e+00 : f32
    %99 = vector.broadcast %cst_45 : f32 to vector<8x8xf32>
    %100 = arith.maximumf %98, %99 : vector<8x8xf32>
    %c8_46 = arith.constant 8 : index
    %c0_47 = arith.constant 0 : index
    %101 = vector.load %arg4[%c8_46, %c0_47] : memref<16x8xf32, #tpu.memory_space<vmem>>, vector<8x8xf32>
    %102 = arith.addf %100, %101 : vector<8x8xf32>
    %cst_48 = arith.constant dense<0xFF800000> : vector<8xf32>
    %103 = vector.multi_reduction <maximumf>, %102, %cst_48 [1] : vector<8x8xf32> to vector<8xf32>
    %104 = vector.shape_cast %103 : vector<8xf32> to vector<8x1xf32>
    %105 = vector.broadcast %104 : vector<8x1xf32> to vector<8x8xf32>
    %106 = arith.subf %102, %105 : vector<8x8xf32>
    %107 = math.exp %106 : vector<8x8xf32>
    %cst_49 = arith.constant dense<0.000000e+00> : vector<8xf32>
    %108 = vector.multi_reduction <add>, %107, %cst_49 [1] : vector<8x8xf32> to vector<8xf32>
    %109 = vector.shape_cast %108 : vector<8xf32> to vector<8x1xf32>
    %110 = vector.broadcast %109 : vector<8x1xf32> to vector<8x8xf32>
    %111 = arith.divf %107, %110 : vector<8x8xf32>
    %cst_50 = arith.constant dense<0.000000e+00> : vector<8x32xf32>
    %112 = tpu.matmul %111, %93, %cst_50 {dimension_numbers = #tpu.dot_dimension_numbers<[1], [0], [0], [1], [0, 0, 1, 1], [], []>} : vector<8x8xf32>, vector<8x32xf32>, vector<8x32xf32> -> vector<8x32xf32>
    %cst_51 = arith.constant 0.000000e+00 : f32
    %113 = vector.broadcast %cst_51 : f32 to vector<8x32xf32>
    %114 = arith.maximumf %112, %113 : vector<8x32xf32>
    %cst_52 = arith.constant dense<0.000000e+00> : vector<1x32xf32>
    %115 = tpu.matmul %6, %114, %cst_52 {dimension_numbers = #tpu.dot_dimension_numbers<[1], [0], [0], [1], [0, 0, 1, 1], [], []>} : vector<1x8xf32>, vector<8x32xf32>, vector<1x32xf32> -> vector<1x32xf32>
    %cst_53 = arith.constant 1.250000e-01 : f32
    %116 = vector.broadcast %cst_53 : f32 to vector<1x32xf32>
    %117 = arith.mulf %115, %116 : vector<1x32xf32>
    %c32_54 = arith.constant 32 : index
    %c0_55 = arith.constant 0 : index
    %118 = vector.load %arg5[%c32_54, %c0_55] : memref<64x32xf32, #tpu.memory_space<vmem>>, vector<32x32xf32>
    %cst_56 = arith.constant dense<0.000000e+00> : vector<1x32xf32>
    %119 = tpu.matmul %117, %118, %cst_56 {dimension_numbers = #tpu.dot_dimension_numbers<[1], [0], [0], [1], [0, 0, 1, 1], [], []>} : vector<1x32xf32>, vector<32x32xf32>, vector<1x32xf32> -> vector<1x32xf32>
    %120 = arith.addf %92, %119 : vector<1x32xf32>
    %121 = tpu.concatenate %63, %120 in 0 : vector<1x32xf32>, vector<1x32xf32> -> vector<2x32xf32>
    %c0_57 = arith.constant 0 : index
    %c0_58 = arith.constant 0 : index
    %122 = vector.load %arg6[%c0_57, %c0_58] : memref<1x32xf32, #tpu.memory_space<vmem>>, vector<1x32xf32>
    %123 = vector.broadcast %122 : vector<1x32xf32> to vector<2x32xf32>
    %124 = arith.addf %121, %123 : vector<2x32xf32>
    %cst_59 = arith.constant 0.000000e+00 : f32
    %125 = vector.broadcast %cst_59 : f32 to vector<2x32xf32>
    %126 = arith.maximumf %124, %125 : vector<2x32xf32>
    %c0_60 = arith.constant 0 : index
    %c0_61 = arith.constant 0 : index
    %127 = vector.load %arg7[%c0_60, %c0_61] : memref<32x4xf32, #tpu.memory_space<vmem>>, vector<32x4xf32>
    %cst_62 = arith.constant dense<0.000000e+00> : vector<2x4xf32>
    %128 = tpu.matmul %126, %127, %cst_62 {dimension_numbers = #tpu.dot_dimension_numbers<[1], [0], [0], [1], [0, 0, 1, 1], [], []>} : vector<2x32xf32>, vector<32x4xf32>, vector<2x4xf32> -> vector<2x4xf32>
    %c0_63 = arith.constant 0 : index
    %c0_64 = arith.constant 0 : index
    %129 = vector.load %arg8[%c0_63, %c0_64] : memref<1x4xf32, #tpu.memory_space<vmem>>, vector<1x4xf32>
    %130 = vector.broadcast %129 : vector<1x4xf32> to vector<2x4xf32>
    %131 = arith.addf %128, %130 : vector<2x4xf32>
    %cst_65 = arith.constant dense<0xFF800000> : vector<4xf32>
    %132 = vector.multi_reduction <maximumf>, %131, %cst_65 [0] : vector<2x4xf32> to vector<4xf32>
    %133 = vector.shape_cast %132 : vector<4xf32> to vector<1x4xf32>
    %134 = vector.broadcast %133 : vector<1x4xf32> to vector<2x4xf32>
    %135 = arith.subf %131, %134 : vector<2x4xf32>
    %136 = math.exp %135 : vector<2x4xf32>
    %cst_66 = arith.constant dense<0.000000e+00> : vector<4xf32>
    %137 = vector.multi_reduction <add>, %136, %cst_66 [0] : vector<2x4xf32> to vector<4xf32>
    %138 = vector.shape_cast %137 : vector<4xf32> to vector<1x4xf32>
    %139 = vector.broadcast %138 : vector<1x4xf32> to vector<2x4xf32>
    %140 = arith.divf %136, %139 : vector<2x4xf32>
    %c0_67 = arith.constant 0 : index
    %c0_68 = arith.constant 0 : index
    %141 = vector.load %arg9[%c0_67, %c0_68] : memref<2x4xf32, #tpu.memory_space<vmem>>, vector<2x4xf32>
    tpu.vector_store %arg9[%c0_67, %c0_68], %140 {strides = array<i32>} : memref<2x4xf32, #tpu.memory_space<vmem>>, vector<2x4xf32>,
    return
  }
}

</mosaic_0001>

<llo_original>
// kernel: tpu_custom_call.1
$region0: #{tpu_custom_call.1}
  #allocation0 [shape = 'u32[]', space=smem, size = 0x4, offset = 0x4, fixed_abs, tag = 'smem constant byte address 0x4 - core index']
  #allocation1 [shape = 'u32[72,128]{1,0:T(1,128)}', space=vmem, size = 0x9000, scoped, tag = 'internal scratch']
  %s0 = inlined_call_operand.vmem [shape: f32[16,16], index: 0, kind: input, shape index: {}]
  %s1 = inlined_call_operand.vmem [shape: f32[16,256], index: 1, kind: input, shape index: {}]
  %s2 = inlined_call_operand.vmem [shape: f32[16,512], index: 2, kind: input, shape index: {}]
  %s3 = inlined_call_operand.vmem [shape: f32[2,16], index: 3, kind: input, shape index: {}]
  %s4 = inlined_call_operand.vmem [shape: f32[16,8], index: 4, kind: input, shape index: {}]
  %s5 = inlined_call_operand.vmem [shape: f32[64,32], index: 5, kind: input, shape index: {}]
  %s6 = inlined_call_operand.vmem [shape: f32[1,32], index: 6, kind: input, shape index: {}]
  %s7 = inlined_call_operand.vmem [shape: f32[32,4], index: 7, kind: input, shape index: {}]
  %s8 = inlined_call_operand.vmem [shape: f32[1,4], index: 8, kind: input, shape index: {}]
  %s9 = inlined_call_operand.hbm [shape: f32[2,4], index: 9, kind: output, shape index: {}]
  %s10 = sld [smem:[#allocation0]]
  $region46: #{tpu_custom_call.1} parent=0
    _
  %s12 = ssub.s32 1, %s10
  %s13 = scalar_select 0, %s12, %s10
  $region1: #{tpu_custom_call.1} parent=0
    #allocation2 [shape = 'u8[1024]{0}', space=vmem, size = 0x400, scoped, tag = 'output window, operand 0, single buffered']
    #allocation3 [shape = 's32[1]{0}', space=sflag, size = 0x4, scoped, tag = 'scoped memory for tpu_custom_call.1']
    %14 = vsyncpa [#allocation3], 0
    // Predicated region
    $region2: #{tpu_custom_call.1} parent=1 // pred_check
      _
    $region3: #{tpu_custom_call.1} parent=1 // pred_check_branch
      %16 = sbr.rel (0) target = $region5
    $region4: #{tpu_custom_call.1} parent=1 // pred_region
      _
    $region5: #{tpu_custom_call.1} parent=1 // pred_fallthru
      _
    // Predicated region
    $region6: #{tpu_custom_call.1} parent=1 // pred_check
      _
    $region7: #{tpu_custom_call.1} parent=1 // pred_check_branch
      %18 = sbr.rel (0) target = $region9
    $region8: #{tpu_custom_call.1} parent=1 // pred_region
      _
    $region9: #{tpu_custom_call.1} parent=1 // pred_fallthru
      _
    // Predicated region
    $region10: #{tpu_custom_call.1} parent=1 // pred_check
      _
    $region11: #{tpu_custom_call.1} parent=1 // pred_check_branch
      %20 = sbr.rel (0) target = $region13
    $region12: #{tpu_custom_call.1} parent=1 // pred_region
      _
    $region13: #{tpu_custom_call.1} parent=1 // pred_fallthru
      _
    // Predicated region
    $region14: #{tpu_custom_call.1} parent=1 // pred_check
      _
    $region15: #{tpu_custom_call.1} parent=1 // pred_check_branch
      %22 = sbr.rel (0) target = $region17
    $region16: #{tpu_custom_call.1} parent=1 // pred_region
      _
    $region17: #{tpu_custom_call.1} parent=1 // pred_fallthru
      _
    // Predicated region
    $region18: #{tpu_custom_call.1} parent=1 // pred_check
      _
    $region19: #{tpu_custom_call.1} parent=1 // pred_check_branch
      %24 = sbr.rel (0) target = $region21
    $region20: #{tpu_custom_call.1} parent=1 // pred_region
      _
    $region21: #{tpu_custom_call.1} parent=1 // pred_fallthru
      _
    // Predicated region
    $region22: #{tpu_custom_call.1} parent=1 // pred_check
      _
    $region23: #{tpu_custom_call.1} parent=1 // pred_check_branch
      %26 = sbr.rel (0) target = $region25
    $region24: #{tpu_custom_call.1} parent=1 // pred_region
      _
    $region25: #{tpu_custom_call.1} parent=1 // pred_fallthru
      _
    // Predicated region
    $region26: #{tpu_custom_call.1} parent=1 // pred_check
      _
    $region27: #{tpu_custom_call.1} parent=1 // pred_check_branch
      %28 = sbr.rel (0) target = $region29
    $region28: #{tpu_custom_call.1} parent=1 // pred_region
      _
    $region29: #{tpu_custom_call.1} parent=1 // pred_fallthru
      _
    // Predicated region
    $region30: #{tpu_custom_call.1} parent=1 // pred_check
      _
    $region31: #{tpu_custom_call.1} parent=1 // pred_check_branch
      %30 = sbr.rel (0) target = $region33
    $region32: #{tpu_custom_call.1} parent=1 // pred_region
      _
    $region33: #{tpu_custom_call.1} parent=1 // pred_fallthru
      _
    // Predicated region
    $region34: #{tpu_custom_call.1} parent=1 // pred_check
      _
    $region35: #{tpu_custom_call.1} parent=1 // pred_check_branch
      %32 = sbr.rel (0) target = $region37
    $region36: #{tpu_custom_call.1} parent=1 // pred_region
      _
    $region37: #{tpu_custom_call.1} parent=1 // pred_fallthru
      _
    %v33 = vld [vmem:[%s0] sm:$0xff]
    %v34 = vld [vmem:[%s0 + $0x8] sm:$0xff]
    %v35 = vld [vmem:[%s2] sm:$0xff]
    %v36 = vld [vmem:[%s2 + $0x8] sm:$0xff]
    %v37 = vld [vmem:[%s2 + $0x10] sm:$0xff]
    %v38 = vld [vmem:[%s2 + $0x18] sm:$0xff]
    %v39 = vld [vmem:[%s2 + $0x20] sm:$0xff]
    %v40 = vld [vmem:[%s2 + $0x28] sm:$0xff]
    %v41 = vld [vmem:[%s2 + $0x30] sm:$0xff]
    %v42 = vld [vmem:[%s2 + $0x38] sm:$0xff]
    %vm43 = vcmask 130048
    %v45 = vsel %vm43, %v33, 0
    %v48 = vsel %vm43, %v34, 0
    %50 = vmatpush.msra.mxu0 0.0
    %51 = vmatpush.msra.mxu0 0.0
    %52 = vmatpush.msra.mxu0 0.0
    %53 = vmatpush.msra.mxu0 0.0
    %54 = vmatpush.msra.mxu0 0.0
    %55 = vmatpush.msra.mxu0 0.0
    %56 = vmatpush.msra.mxu0 0.0
    %57 = vmatpush.msra.mxu0 0.0
    %58 = vmatpush.msra.mxu0 0.0
    %59 = vmatpush.msra.mxu0 0.0
    %60 = vmatpush.msra.mxu0 0.0
    %61 = vmatpush.msra.mxu0 0.0
    %62 = vmatpush.msra.mxu0 0.0
    %63 = vmatpush.msra.mxu0 0.0
    %64 = vmatpush.msra.mxu0 %v39
    %65 = vmatpush.msra.mxu0 %v35
    %66 = vmatmul.f32.gmra.mxu0 %v45
    %v67 = vpop.f32.mrf.mxu0
    %v68 = vadd.f32 0.0, %v67
    %69 = vmatmul.f32.gmra.mxu0 %v48
    %v70 = vpop.f32.mrf.mxu0
    %v71 = vadd.f32 0.0, %v70
    %72 = vdwg.mxu0
    %73 = vmatpush.msra.mxu0 0.0
    %74 = vmatpush.msra.mxu0 0.0
    %75 = vmatpush.msra.mxu0 0.0
    %76 = vmatpush.msra.mxu0 0.0
    %77 = vmatpush.msra.mxu0 0.0
    %78 = vmatpush.msra.mxu0 0.0
    %79 = vmatpush.msra.mxu0 0.0
    %80 = vmatpush.msra.mxu0 0.0
    %81 = vmatpush.msra.mxu0 0.0
    %82 = vmatpush.msra.mxu0 0.0
    %83 = vmatpush.msra.mxu0 0.0
    %84 = vmatpush.msra.mxu0 0.0
    %85 = vmatpush.msra.mxu0 0.0
    %86 = vmatpush.msra.mxu0 0.0
    %87 = vmatpush.msra.mxu0 %v40
    %88 = vmatpush.msra.mxu0 %v36
    %89 = vmatmul.f32.gmra.mxu0 %v45
    %v90 = vpop.f32.mrf.mxu0
    %v91 = vadd.f32 0.0, %v90
    %92 = vmatmul.f32.gmra.mxu0 %v48
    %v93 = vpop.f32.mrf.mxu0
    %v94 = vadd.f32 0.0, %v93
    %95 = vdwg.mxu0
    %96 = vmatpush.msra.mxu0 0.0
    %97 = vmatpush.msra.mxu0 0.0
    %98 = vmatpush.msra.mxu0 0.0
    %99 = vmatpush.msra.mxu0 0.0
    %100 = vmatpush.msra.mxu0 0.0
    %101 = vmatpush.msra.mxu0 0.0
    %102 = vmatpush.msra.mxu0 0.0
    %103 = vmatpush.msra.mxu0 0.0
    %104 = vmatpush.msra.mxu0 0.0
    %105 = vmatpush.msra.mxu0 0.0
    %106 = vmatpush.msra.mxu0 0.0
    %107 = vmatpush.msra.mxu0 0.0
    %108 = vmatpush.msra.mxu0 0.0
    %109 = vmatpush.msra.mxu0 0.0
    %110 = vmatpush.msra.mxu0 %v41
    %111 = vmatpush.msra.mxu0 %v37
    %112 = vmatmul.f32.gmra.mxu0 %v45
    %v113 = vpop.f32.mrf.mxu0
    %v114 = vadd.f32 0.0, %v113
    %115 = vmatmul.f32.gmra.mxu0 %v48
    %v116 = vpop.f32.mrf.mxu0
    %v117 = vadd.f32 0.0, %v116
    %118 = vdwg.mxu0
    %119 = vmatpush.msra.mxu0 0.0
    %120 = vmatpush.msra.mxu0 0.0
    %121 = vmatpush.msra.mxu0 0.0
    %122 = vmatpush.msra.mxu0 0.0
    %123 = vmatpush.msra.mxu0 0.0
    %124 = vmatpush.msra.mxu0 0.0
    %125 = vmatpush.msra.mxu0 0.0
    %126 = vmatpush.msra.mxu0 0.0
    %127 = vmatpush.msra.mxu0 0.0
    %128 = vmatpush.msra.mxu0 0.0
    %129 = vmatpush.msra.mxu0 0.0
    %130 = vmatpush.msra.mxu0 0.0
    %131 = vmatpush.msra.mxu0 0.0
    %132 = vmatpush.msra.mxu0 0.0
    %133 = vmatpush.msra.mxu0 %v42
    %134 = vmatpush.msra.mxu0 %v38
    %135 = vmatmul.f32.gmra.mxu0 %v45
    %v136 = vpop.f32.mrf.mxu0
    %v137 = vadd.f32 0.0, %v136
    %138 = vmatmul.f32.gmra.mxu0 %v48
    %v139 = vpop.f32.mrf.mxu0
    %v140 = vadd.f32 0.0, %v139
    %141 = vdwg.mxu0
    %v142 = vld [vmem:[%s3] sm:$0x3]
    %v143 = vld [vmem:[%s1] sm:$0xff]
    %v144 = vld [vmem:[%s1 + $0x8] sm:$0xff]
    %v145 = vld [vmem:[%s1 + $0x10] sm:$0xff]
    %v146 = vld [vmem:[%s1 + $0x18] sm:$0xff]
    %v148 = vsel %vm43, %v142, 0
    %150 = vmatpush.msra.mxu0 0.0
    %151 = vmatpush.msra.mxu0 0.0
    %152 = vmatpush.msra.mxu0 0.0
    %153 = vmatpush.msra.mxu0 0.0
    %154 = vmatpush.msra.mxu0 0.0
    %155 = vmatpush.msra.mxu0 0.0
    %156 = vmatpush.msra.mxu0 0.0
    %157 = vmatpush.msra.mxu0 0.0
    %158 = vmatpush.msra.mxu0 0.0
    %159 = vmatpush.msra.mxu0 0.0
    %160 = vmatpush.msra.mxu0 0.0
    %161 = vmatpush.msra.mxu0 0.0
    %162 = vmatpush.msra.mxu0 0.0
    %163 = vmatpush.msra.mxu0 0.0
    %164 = vmatpush.msra.mxu0 %v145
    %165 = vmatpush.msra.mxu0 %v143
    %166 = vmatmul.f32.gmra.mxu0 %v148
    %v167 = vpop.f32.mrf.mxu0
    %v168 = vadd.f32 0.0, %v167
    %169 = vdwg.mxu0
    %170 = vmatpush.msra.mxu0 0.0
    %171 = vmatpush.msra.mxu0 0.0
    %172 = vmatpush.msra.mxu0 0.0
    %173 = vmatpush.msra.mxu0 0.0
    %174 = vmatpush.msra.mxu0 0.0
    %175 = vmatpush.msra.mxu0 0.0
    %176 = vmatpush.msra.mxu0 0.0
    %177 = vmatpush.msra.mxu0 0.0
    %178 = vmatpush.msra.mxu0 0.0
    %179 = vmatpush.msra.mxu0 0.0
    %180 = vmatpush.msra.mxu0 0.0
    %181 = vmatpush.msra.mxu0 0.0
    %182 = vmatpush.msra.mxu0 0.0
    %183 = vmatpush.msra.mxu0 0.0
    %184 = vmatpush.msra.mxu0 %v146
    %185 = vmatpush.msra.mxu0 %v144
    %186 = vmatmul.f32.gmra.mxu0 %v148
    %v187 = vpop.f32.mrf.mxu0
    %v188 = vadd.f32 0.0, %v187
    %189 = vdwg.mxu0
    %191 = vset.pattern.permute.xlu0 0
    %192 = vperm.xlu0 %191, %v91
    %v193 = vpop.permute.xlu0 %192
    %v195 = vperm.slane %v168, 0
    %v196 = vadd.f32 %v193, %v195
    %v197 = vmax.f32 %v196, 0.0
    %v198 = vld [vmem:[%s4] sm:$0xff]
    %v199 = vadd.f32 %v197, %v198
    %vm200 = vcmask 64512
    %v201 = vsel %vm200, %v199, -inf
    %202 = vmax.xlane.f32.xlu0 %v201
    %v203 = vpop.xlane.xlu0 %202
    %v204 = vsub.f32 %v199, %v203
    %v205 = vmul.f32 %v204, 1.442695
    %v206 = vpow.pop %v205
    %v207 = vsel %vm200, %v206, 0.0
    %208 = vadd.xlane.f32.xlu0 %v207
    %v209 = vpop.xlane.xlu0 %208
    %v210 = vrcp.pop %v209
    %v211 = vmul.f32 %v209, %v210
    %v212 = vsub.f32 1.0, %v211
    %v213 = vmul.f32 %v210, %v212
    %v214 = vadd.f32 %v210, %v213
    %vm215 = vweird.f32 %v209
    %vm216 = vweird.f32 %v210
    %vm217 = vmor %vm215, %vm216
    %v218 = vsel %vm217, %v210, %v214
    %v219 = vand.u32 2147483647, %v209
    %vm220 = vcmp.eq.f32.partialorder %v219, 8.507059e+37
    %v221 = vand.u32 %v209, 2147483648
    %v222 = vor.u32 1.1754944e-38, %v221
    %v223 = vsel %vm220, %v222, %v218
    %v224 = vmul.f32 %v206, %v223
    %v226 = vsel %vm200, %v224, 0
    %228 = vmatpush.msra.mxu0 0.0
    %229 = vmatpush.msra.mxu0 0.0
    %230 = vmatpush.msra.mxu0 0.0
    %231 = vmatpush.msra.mxu0 0.0
    %232 = vmatpush.msra.mxu0 0.0
    %233 = vmatpush.msra.mxu0 0.0
    %234 = vmatpush.msra.mxu0 0.0
    %235 = vmatpush.msra.mxu0 0.0
    %236 = vmatpush.msra.mxu0 0.0
    %237 = vmatpush.msra.mxu0 0.0
    %238 = vmatpush.msra.mxu0 0.0
    %239 = vmatpush.msra.mxu0 0.0
    %240 = vmatpush.msra.mxu0 0.0
    %241 = vmatpush.msra.mxu0 0.0
    %242 = vmatpush.msra.mxu0 0.0
    %243 = vmatpush.msra.mxu0 %v68
    %244 = vmatmul.f32.gmra.mxu0 %v226
    %v245 = vpop.f32.mrf.mxu0
    %v246 = vadd.f32 0.0, %v245
    %247 = vdwg.mxu0
    %v248 = vmax.f32 %v246, 0.0
    %v250 = vsel %vm200, 1.0, 0
    %252 = vmatpush.msra.mxu0 0.0
    %253 = vmatpush.msra.mxu0 0.0
    %254 = vmatpush.msra.mxu0 0.0
    %255 = vmatpush.msra.mxu0 0.0
    %256 = vmatpush.msra.mxu0 0.0
    %257 = vmatpush.msra.mxu0 0.0
    %258 = vmatpush.msra.mxu0 0.0
    %259 = vmatpush.msra.mxu0 0.0
    %260 = vmatpush.msra.mxu0 0.0
    %261 = vmatpush.msra.mxu0 0.0
    %262 = vmatpush.msra.mxu0 0.0
    %263 = vmatpush.msra.mxu0 0.0
    %264 = vmatpush.msra.mxu0 0.0
    %265 = vmatpush.msra.mxu0 0.0
    %266 = vmatpush.msra.mxu0 0.0
    %267 = vmatpush.msra.mxu0 %v248
    %268 = vmatmul.f32.gmra.mxu0 %v250
    %v269 = vpop.f32.mrf.mxu0
    %v270 = vadd.f32 0.0, %v269
    %271 = vdwg.mxu0
    %v272 = vmul.f32 %v270, 0.125
    %v273 = vld [vmem:[%s5] sm:$0xff]
    %v274 = vld [vmem:[%s5 + $0x8] sm:$0xff]
    %v275 = vld [vmem:[%s5 + $0x10] sm:$0xff]
    %v276 = vld [vmem:[%s5 + $0x18] sm:$0xff]
    %278 = vset.pattern.permute.xlu0 0
    %279 = vperm.xlu0 %278, %v137
    %v280 = vpop.permute.xlu0 %279
    %v282 = vperm.slane %v168, 1
    %v283 = vadd.f32 %v280, %v282
    %v284 = vmax.f32 %v283, 0.0
    %v285 = vadd.f32 %v284, %v198
    %v286 = vsel %vm200, %v285, -inf
    %287 = vmax.xlane.f32.xlu0 %v286
    %v288 = vpop.xlane.xlu0 %287
    %v289 = vsub.f32 %v285, %v288
    %v290 = vmul.f32 %v289, 1.442695
    %v291 = vpow.pop %v290
    %v292 = vsel %vm200, %v291, 0.0
    %293 = vadd.xlane.f32.xlu0 %v292
    %v294 = vpop.xlane.xlu0 %293
    %v295 = vrcp.pop %v294
    %v296 = vmul.f32 %v294, %v295
    %v297 = vsub.f32 1.0, %v296
    %v298 = vmul.f32 %v295, %v297
    %v299 = vadd.f32 %v295, %v298
    %vm300 = vweird.f32 %v294
    %vm301 = vweird.f32 %v295
    %vm302 = vmor %vm300, %vm301
    %v303 = vsel %vm302, %v295, %v299
    %v304 = vand.u32 2147483647, %v294
    %vm305 = vcmp.eq.f32.partialorder %v304, 8.507059e+37
    %v306 = vand.u32 %v294, 2147483648
    %v307 = vor.u32 1.1754944e-38, %v306
    %v308 = vsel %vm305, %v307, %v303
    %v309 = vmul.f32 %v291, %v308
    %v311 = vsel %vm200, %v309, 0
    %313 = vmatpush.msra.mxu0 0.0
    %314 = vmatpush.msra.mxu0 0.0
    %315 = vmatpush.msra.mxu0 0.0
    %316 = vmatpush.msra.mxu0 0.0
    %317 = vmatpush.msra.mxu0 0.0
    %318 = vmatpush.msra.mxu0 0.0
    %319 = vmatpush.msra.mxu0 0.0
    %320 = vmatpush.msra.mxu0 0.0
    %321 = vmatpush.msra.mxu0 0.0
    %322 = vmatpush.msra.mxu0 0.0
    %323 = vmatpush.msra.mxu0 0.0
    %324 = vmatpush.msra.mxu0 0.0
    %325 = vmatpush.msra.mxu0 0.0
    %326 = vmatpush.msra.mxu0 0.0
    %327 = vmatpush.msra.mxu0 0.0
    %328 = vmatpush.msra.mxu0 %v114
    %329 = vmatmul.f32.gmra.mxu0 %v311
    %v330 = vpop.f32.mrf.mxu0
    %v331 = vadd.f32 0.0, %v330
    %332 = vdwg.mxu0
    %v333 = vmax.f32 %v331, 0.0
    %334 = vmatpush.msra.mxu0 0.0
    %335 = vmatpush.msra.mxu0 0.0
    %336 = vmatpush.msra.mxu0 0.0
    %337 = vmatpush.msra.mxu0 0.0
    %338 = vmatpush.msra.mxu0 0.0
    %339 = vmatpush.msra.mxu0 0.0
    %340 = vmatpush.msra.mxu0 0.0
    %341 = vmatpush.msra.mxu0 0.0
    %342 = vmatpush.msra.mxu0 0.0
    %343 = vmatpush.msra.mxu0 0.0
    %344 = vmatpush.msra.mxu0 0.0
    %345 = vmatpush.msra.mxu0 0.0
    %346 = vmatpush.msra.mxu0 0.0
    %347 = vmatpush.msra.mxu0 0.0
    %348 = vmatpush.msra.mxu0 0.0
    %349 = vmatpush.msra.mxu0 %v333
    %350 = vmatmul.f32.gmra.mxu0 %v250
    %v351 = vpop.f32.mrf.mxu0
    %v352 = vadd.f32 0.0, %v351
    %353 = vdwg.mxu0
    %v354 = vmul.f32 %v352, 0.125
    %v355 = vld [vmem:[%s5 + $0x20] sm:$0xff]
    %v356 = vld [vmem:[%s5 + $0x28] sm:$0xff]
    %v357 = vld [vmem:[%s5 + $0x30] sm:$0xff]
    %v358 = vld [vmem:[%s5 + $0x38] sm:$0xff]
    %vm359 = vcmask 261120
    %v361 = vsel %vm359, %v354, 0
    %363 = vmatpush.msra.mxu0 0.0
    %364 = vmatpush.msra.mxu0 0.0
    %365 = vmatpush.msra.mxu0 0.0
    %366 = vmatpush.msra.mxu0 0.0
    %367 = vmatpush.msra.mxu0 0.0
    %368 = vmatpush.msra.mxu0 0.0
    %369 = vmatpush.msra.mxu0 0.0
    %370 = vmatpush.msra.mxu0 0.0
    %371 = vmatpush.msra.mxu0 0.0
    %372 = vmatpush.msra.mxu0 0.0
    %373 = vmatpush.msra.mxu0 0.0
    %374 = vmatpush.msra.mxu0 0.0
    %375 = vmatpush.msra.mxu0 %v358
    %376 = vmatpush.msra.mxu0 %v357
    %377 = vmatpush.msra.mxu0 %v356
    %378 = vmatpush.msra.mxu0 %v355
    %379 = vmatmul.f32.gmra.mxu0 %v361
    %v380 = vpop.f32.mrf.mxu0
    %v381 = vadd.f32 0.0, %v380
    %382 = vdwg.mxu0
    %v384 = vsel %vm359, %v272, 0
    %386 = vmatpush.msra.mxu0 0.0
    %387 = vmatpush.msra.mxu0 0.0
    %388 = vmatpush.msra.mxu0 0.0
    %389 = vmatpush.msra.mxu0 0.0
    %390 = vmatpush.msra.mxu0 0.0
    %391 = vmatpush.msra.mxu0 0.0
    %392 = vmatpush.msra.mxu0 0.0
    %393 = vmatpush.msra.mxu0 0.0
    %394 = vmatpush.msra.mxu0 0.0
    %395 = vmatpush.msra.mxu0 0.0
    %396 = vmatpush.msra.mxu0 0.0
    %397 = vmatpush.msra.mxu0 0.0
    %398 = vmatpush.msra.mxu0 %v276
    %399 = vmatpush.msra.mxu0 %v275
    %400 = vmatpush.msra.mxu0 %v274
    %401 = vmatpush.msra.mxu0 %v273
    %402 = vmatmul.f32.gmra.mxu0 %v384
    %v403 = vpop.f32.mrf.mxu0
    %v404 = vadd.f32 %v381, %v403
    %405 = vdwg.mxu0
    %407 = vset.pattern.permute.xlu0 0
    %408 = vperm.xlu0 %407, %v94
    %v409 = vpop.permute.xlu0 %408
    %v411 = vperm.slane %v188, 0
    %v412 = vadd.f32 %v409, %v411
    %v413 = vmax.f32 %v412, 0.0
    %v414 = vld [vmem:[%s4 + $0x8] sm:$0xff]
    %v415 = vadd.f32 %v413, %v414
    %v416 = vsel %vm200, %v415, -inf
    %417 = vmax.xlane.f32.xlu0 %v416
    %v418 = vpop.xlane.xlu0 %417
    %v419 = vsub.f32 %v415, %v418
    %v420 = vmul.f32 %v419, 1.442695
    %v421 = vpow.pop %v420
    %v422 = vsel %vm200, %v421, 0.0
    %423 = vadd.xlane.f32.xlu0 %v422
    %v424 = vpop.xlane.xlu0 %423
    %v425 = vrcp.pop %v424
    %v426 = vmul.f32 %v424, %v425
    %v427 = vsub.f32 1.0, %v426
    %v428 = vmul.f32 %v425, %v427
    %v429 = vadd.f32 %v425, %v428
    %vm430 = vweird.f32 %v424
    %vm431 = vweird.f32 %v425
    %vm432 = vmor %vm430, %vm431
    %v433 = vsel %vm432, %v425, %v429
    %v434 = vand.u32 2147483647, %v424
    %vm435 = vcmp.eq.f32.partialorder %v434, 8.507059e+37
    %v436 = vand.u32 %v424, 2147483648
    %v437 = vor.u32 1.1754944e-38, %v436
    %v438 = vsel %vm435, %v437, %v433
    %v439 = vmul.f32 %v421, %v438
    %v441 = vsel %vm200, %v439, 0
    %443 = vmatpush.msra.mxu0 0.0
    %444 = vmatpush.msra.mxu0 0.0
    %445 = vmatpush.msra.mxu0 0.0
    %446 = vmatpush.msra.mxu0 0.0
    %447 = vmatpush.msra.mxu0 0.0
    %448 = vmatpush.msra.mxu0 0.0
    %449 = vmatpush.msra.mxu0 0.0
    %450 = vmatpush.msra.mxu0 0.0
    %451 = vmatpush.msra.mxu0 0.0
    %452 = vmatpush.msra.mxu0 0.0
    %453 = vmatpush.msra.mxu0 0.0
    %454 = vmatpush.msra.mxu0 0.0
    %455 = vmatpush.msra.mxu0 0.0
    %456 = vmatpush.msra.mxu0 0.0
    %457 = vmatpush.msra.mxu0 0.0
    %458 = vmatpush.msra.mxu0 %v71
    %459 = vmatmul.f32.gmra.mxu0 %v441
    %v460 = vpop.f32.mrf.mxu0
    %v461 = vadd.f32 0.0, %v460
    %462 = vdwg.mxu0
    %v463 = vmax.f32 %v461, 0.0
    %464 = vmatpush.msra.mxu0 0.0
    %465 = vmatpush.msra.mxu0 0.0
    %466 = vmatpush.msra.mxu0 0.0
    %467 = vmatpush.msra.mxu0 0.0
    %468 = vmatpush.msra.mxu0 0.0
    %469 = vmatpush.msra.mxu0 0.0
    %470 = vmatpush.msra.mxu0 0.0
    %471 = vmatpush.msra.mxu0 0.0
    %472 = vmatpush.msra.mxu0 0.0
    %473 = vmatpush.msra.mxu0 0.0
    %474 = vmatpush.msra.mxu0 0.0
    %475 = vmatpush.msra.mxu0 0.0
    %476 = vmatpush.msra.mxu0 0.0
    %477 = vmatpush.msra.mxu0 0.0
    %478 = vmatpush.msra.mxu0 0.0
    %479 = vmatpush.msra.mxu0 %v463
    %480 = vmatmul.f32.gmra.mxu0 %v250
    %v481 = vpop.f32.mrf.mxu0
    %v482 = vadd.f32 0.0, %v481
    %483 = vdwg.mxu0
    %v484 = vmul.f32 %v482, 0.125
    %486 = vset.pattern.permute.xlu0 0
    %487 = vperm.xlu0 %486, %v140
    %v488 = vpop.permute.xlu0 %487
    %v490 = vperm.slane %v188, 1
    %v491 = vadd.f32 %v488, %v490
    %v492 = vmax.f32 %v491, 0.0
    %v493 = vadd.f32 %v492, %v414
    %v494 = vsel %vm200, %v493, -inf
    %495 = vmax.xlane.f32.xlu0 %v494
    %v496 = vpop.xlane.xlu0 %495
    %v497 = vsub.f32 %v493, %v496
    %v498 = vmul.f32 %v497, 1.442695
    %v499 = vpow.pop %v498
    %v500 = vsel %vm200, %v499, 0.0
    %501 = vadd.xlane.f32.xlu0 %v500
    %v502 = vpop.xlane.xlu0 %501
    %v503 = vrcp.pop %v502
    %v504 = vmul.f32 %v502, %v503
    %v505 = vsub.f32 1.0, %v504
    %v506 = vmul.f32 %v503, %v505
    %v507 = vadd.f32 %v503, %v506
    %vm508 = vweird.f32 %v502
    %vm509 = vweird.f32 %v503
    %vm510 = vmor %vm508, %vm509
    %v511 = vsel %vm510, %v503, %v507
    %v512 = vand.u32 2147483647, %v502
    %vm513 = vcmp.eq.f32.partialorder %v512, 8.507059e+37
    %v514 = vand.u32 %v502, 2147483648
    %v515 = vor.u32 1.1754944e-38, %v514
    %v516 = vsel %vm513, %v515, %v511
    %v517 = vmul.f32 %v499, %v516
    %v519 = vsel %vm200, %v517, 0
    %521 = vmatpush.msra.mxu0 0.0
    %522 = vmatpush.msra.mxu0 0.0
    %523 = vmatpush.msra.mxu0 0.0
    %524 = vmatpush.msra.mxu0 0.0
    %525 = vmatpush.msra.mxu0 0.0
    %526 = vmatpush.msra.mxu0 0.0
    %527 = vmatpush.msra.mxu0 0.0
    %528 = vmatpush.msra.mxu0 0.0
    %529 = vmatpush.msra.mxu0 0.0
    %530 = vmatpush.msra.mxu0 0.0
    %531 = vmatpush.msra.mxu0 0.0
    %532 = vmatpush.msra.mxu0 0.0
    %533 = vmatpush.msra.mxu0 0.0
    %534 = vmatpush.msra.mxu0 0.0
    %535 = vmatpush.msra.mxu0 0.0
    %536 = vmatpush.msra.mxu0 %v117
    %537 = vmatmul.f32.gmra.mxu0 %v519
    %v538 = vpop.f32.mrf.mxu0
    %v539 = vadd.f32 0.0, %v538
    %540 = vdwg.mxu0
    %v541 = vmax.f32 %v539, 0.0
    %542 = vmatpush.msra.mxu0 0.0
    %543 = vmatpush.msra.mxu0 0.0
    %544 = vmatpush.msra.mxu0 0.0
    %545 = vmatpush.msra.mxu0 0.0
    %546 = vmatpush.msra.mxu0 0.0
    %547 = vmatpush.msra.mxu0 0.0
    %548 = vmatpush.msra.mxu0 0.0
    %549 = vmatpush.msra.mxu0 0.0
    %550 = vmatpush.msra.mxu0 0.0
    %551 = vmatpush.msra.mxu0 0.0
    %552 = vmatpush.msra.mxu0 0.0
    %553 = vmatpush.msra.mxu0 0.0
    %554 = vmatpush.msra.mxu0 0.0
    %555 = vmatpush.msra.mxu0 0.0
    %556 = vmatpush.msra.mxu0 0.0
    %557 = vmatpush.msra.mxu0 %v541
    %558 = vmatmul.f32.gmra.mxu0 %v250
    %v559 = vpop.f32.mrf.mxu0
    %v560 = vadd.f32 0.0, %v559
    %561 = vdwg.mxu0
    %v562 = vmul.f32 %v560, 0.125
    %v564 = vsel %vm359, %v562, 0
    %566 = vmatpush.msra.mxu0 0.0
    %567 = vmatpush.msra.mxu0 0.0
    %568 = vmatpush.msra.mxu0 0.0
    %569 = vmatpush.msra.mxu0 0.0
    %570 = vmatpush.msra.mxu0 0.0
    %571 = vmatpush.msra.mxu0 0.0
    %572 = vmatpush.msra.mxu0 0.0
    %573 = vmatpush.msra.mxu0 0.0
    %574 = vmatpush.msra.mxu0 0.0
    %575 = vmatpush.msra.mxu0 0.0
    %576 = vmatpush.msra.mxu0 0.0
    %577 = vmatpush.msra.mxu0 0.0
    %578 = vmatpush.msra.mxu0 %v358
    %579 = vmatpush.msra.mxu0 %v357
    %580 = vmatpush.msra.mxu0 %v356
    %581 = vmatpush.msra.mxu0 %v355
    %582 = vmatmul.f32.gmra.mxu0 %v564
    %v583 = vpop.f32.mrf.mxu0
    %v584 = vadd.f32 0.0, %v583
    %585 = vdwg.mxu0
    %v587 = vsel %vm359, %v484, 0
    %589 = vmatpush.msra.mxu0 0.0
    %590 = vmatpush.msra.mxu0 0.0
    %591 = vmatpush.msra.mxu0 0.0
    %592 = vmatpush.msra.mxu0 0.0
    %593 = vmatpush.msra.mxu0 0.0
    %594 = vmatpush.msra.mxu0 0.0
    %595 = vmatpush.msra.mxu0 0.0
    %596 = vmatpush.msra.mxu0 0.0
    %597 = vmatpush.msra.mxu0 0.0
    %598 = vmatpush.msra.mxu0 0.0
    %599 = vmatpush.msra.mxu0 0.0
    %600 = vmatpush.msra.mxu0 0.0
    %601 = vmatpush.msra.mxu0 %v276
    %602 = vmatpush.msra.mxu0 %v275
    %603 = vmatpush.msra.mxu0 %v274
    %604 = vmatpush.msra.mxu0 %v273
    %605 = vmatmul.f32.gmra.mxu0 %v587
    %v606 = vpop.f32.mrf.mxu0
    %v607 = vadd.f32 %v584, %v606
    %608 = vdwg.mxu0
    %v610 = vrot.slane %v607, 7
    %vm612 = vcmask 1040384
    %v613 = vsel %vm612, %v404, %v610
    %v614 = vld [vmem:[%s6] sm:$0x1]
    %v616 = vperm.slane %v614, 0
    %v618 = vadd.f32 %v613, %v616
    %v619 = vmax.f32 %v618, 0.0
    %v620 = vld [vmem:[%s7] sm:$0xff]
    %v621 = vld [vmem:[%s7 + $0x8] sm:$0xff]
    %v622 = vld [vmem:[%s7 + $0x10] sm:$0xff]
    %v623 = vld [vmem:[%s7 + $0x18] sm:$0xff]
    %v624 = vld [vmem:[%s8] sm:$0x1]
    %v626 = vperm.slane %v624, 0
    %v629 = vsel %vm359, %v619, 0
    %631 = vmatpush.msra.mxu0 0.0
    %632 = vmatpush.msra.mxu0 0.0
    %633 = vmatpush.msra.mxu0 0.0
    %634 = vmatpush.msra.mxu0 0.0
    %635 = vmatpush.msra.mxu0 0.0
    %636 = vmatpush.msra.mxu0 0.0
    %637 = vmatpush.msra.mxu0 0.0
    %638 = vmatpush.msra.mxu0 0.0
    %639 = vmatpush.msra.mxu0 0.0
    %640 = vmatpush.msra.mxu0 0.0
    %641 = vmatpush.msra.mxu0 0.0
    %642 = vmatpush.msra.mxu0 0.0
    %643 = vmatpush.msra.mxu0 %v623
    %644 = vmatpush.msra.mxu0 %v622
    %645 = vmatpush.msra.mxu0 %v621
    %646 = vmatpush.msra.mxu0 %v620
    %647 = vmatmul.f32.gmra.mxu0 %v629
    %v648 = vpop.f32.mrf.mxu0
    %v649 = vadd.f32 %v626, %v648
    %650 = vdwg.mxu0
    %vm651 = vcmask 25600
    %v652 = vsel %vm651, %v649, -inf
    %v653 = vrot.slane %v652, 4
    %v654 = vmax.f32 %v652, %v653
    %v655 = vrot.slane %v654, 2
    %v656 = vmax.f32 %v654, %v655
    %v657 = vrot.slane %v656, 1
    %v658 = vmax.f32 %v656, %v657
    %v659 = vsub.f32 %v649, %v658
    %v660 = vmul.f32 %v659, 1.442695
    %v661 = vpow.pop %v660
    %v662 = vsel %vm651, %v661, 0.0
    %v663 = vrot.slane %v662, 4
    %v664 = vadd.f32 %v662, %v663
    %v665 = vrot.slane %v664, 2
    %v666 = vadd.f32 %v664, %v665
    %v667 = vrot.slane %v666, 1
    %v668 = vadd.f32 %v666, %v667
    %v669 = vrcp.pop %v668
    %v670 = vmul.f32 %v668, %v669
    %v671 = vsub.f32 1.0, %v670
    %v672 = vmul.f32 %v669, %v671
    %v673 = vadd.f32 %v669, %v672
    %vm674 = vweird.f32 %v668
    %vm675 = vweird.f32 %v669
    %vm676 = vmor %vm674, %vm675
    %v677 = vsel %vm676, %v669, %v673
    %v678 = vand.u32 2147483647, %v668
    %vm679 = vcmp.eq.f32.partialorder %v678, 8.507059e+37
    %v680 = vand.u32 %v668, 2147483648
    %v681 = vor.u32 1.1754944e-38, %v680
    %v682 = vsel %vm679, %v681, %v677
    %v683 = vmul.f32 %v661, %v682
    %684 = vst.msk [vmem:[#allocation2] sm:$0x3] %vm651, %v683
    // Predicated region
    $region38: #{tpu_custom_call.1} parent=1 // pred_check
      _
    $region39: #{tpu_custom_call.1} parent=1 // pred_check_branch
      %686 = sbr.rel (0) target = $region41
    $region40: #{tpu_custom_call.1} parent=1 // pred_region
      %688 = vsyncadd [#allocation3], 0
      %s690 = sshll.u32 [#allocation2], 4
      %s691 = int_to_ptr.vmem [resolvable:$true] %s690
      %s692 = sshll.u32 %s9, 4
      %s693 = int_to_ptr.hbm [resolvable:$true] %s692
      %695 = dma.vmem_to_hbm [thread:$0]  %s691, 32, %s693, [#allocation3]
    $region41: #{tpu_custom_call.1} parent=1 // pred_fallthru
      _
    // Predicated region
    $region42: #{tpu_custom_call.1} parent=1 // pred_check
      _
    $region43: #{tpu_custom_call.1} parent=1 // pred_check_branch
      %697 = sbr.rel (0) target = $region45
    $region44: #{tpu_custom_call.1} parent=1 // pred_region
      %699 = dma.done [#allocation3], 32
    $region45: #{tpu_custom_call.1} parent=1 // pred_fallthru
      _
    %700 = vsyncpa [#allocation3], 1

</llo_original>
